<compile_context>
chip_gen: v7x
topology: tpu7x:2x2x1
jax: 0.10.0
libtpu: 0.0.40
codegen_flags: <defaults>
</compile_context>

<pallas_src>
import functools

import jax
import jax.numpy as jnp
from jax.experimental import pallas as pl
from jax.experimental.pallas import tpu as pltpu


def _round_up(n, m):
    return ((n + m - 1) // m) * m


def _fused_linear_kernel(x_ref, wt_ref, b_ref, o_ref):
    # x_ref : (TB, K)   VMEM   input rows (batch tile)
    # wt_ref: (K,  Np)  VMEM   pre-transposed, concatenated, N-padded weights
    # b_ref : (1,  Np)  VMEM   concatenated, N-padded biases
    # o_ref : (TB, Np)  VMEM   lane-dense output tile
    x = x_ref[...].astype(wt_ref.dtype)          # no-op for f32 params; bf16 cast otherwise
    acc = jnp.dot(x, wt_ref[...], preferred_element_type=jnp.float32)
    o_ref[...] = (acc + b_ref[...].astype(jnp.float32)).astype(o_ref.dtype)


@functools.partial(jax.jit, static_argnums=(3,))
def _fused_forward(x, wt_pad, b_pad, total_out):
    """One fused matmul for all heads.

    x: (B, K) f32, wt_pad: (K, Np), b_pad: (1, Np).  Returns padded-width (B, Np);
    per-head column slices are taken by the caller.
    """
    B, K = x.shape
    _, Np = wt_pad.shape

    # Batch tiling (static shapes under jit, plain Python branching is fine).
    if B <= 256:
        tb = _round_up(B, 8)            # single block, single grid step
    else:
        tb = 256                        # pipelined / megacore-splittable grid
    Bp = _round_up(B, tb)

    if Bp != B:
        x_in = jnp.zeros((Bp, K), x.dtype).at[:B].set(x)
    else:
        x_in = x                        # aligned batch: no pre-kernel copy at all

    # True (unpadded) work for XLA's scheduler.
    x_bytes = jnp.dtype(x.dtype).itemsize
    w_bytes = jnp.dtype(wt_pad.dtype).itemsize
    cost = pl.CostEstimate(
        flops=2 * B * K * total_out,
        transcendentals=0,
        bytes_accessed=(B * K + B * total_out) * x_bytes
        + (K * total_out + total_out) * w_bytes,
    )

    y_pad = pl.pallas_call(
        _fused_linear_kernel,
        out_shape=jax.ShapeDtypeStruct((Bp, Np), x.dtype),
        grid_spec=pltpu.PrefetchScalarGridSpec(
            num_scalar_prefetch=0,
            grid=(Bp // tb,),
            in_specs=[
                pl.BlockSpec((tb, K), lambda i: (i, 0)),
                pl.BlockSpec((K, Np), lambda i: (0, 0)),
                pl.BlockSpec((1, Np), lambda i: (0, 0)),
            ],
            out_specs=pl.BlockSpec((tb, Np), lambda i: (i, 0)),
        ),
        compiler_params=pltpu.CompilerParams(
            dimension_semantics=("parallel",)),
        cost_estimate=cost,
    )(x_in, wt_pad, b_pad)

    return y_pad[:B]


class MultiHeadPallas:
    """JAX/Pallas equivalent of the PyTorch MultiHead module (fused single-kernel forward)."""

    def __init__(self, in_size, out_sizes, key, param_dtype=jnp.float32):
        self.in_size = int(in_size)
        self.out_sizes = [int(o) for o in out_sizes]
        self.n_out = len(self.out_sizes)
        self.total_out = sum(self.out_sizes)
        self.param_dtype = param_dtype

        # Per-head parameters (reference / state-dict parity with nn.Linear), f32.
        self.params = []
        bound = 1.0 / float(jnp.sqrt(jnp.float32(self.in_size)))
        for i, out in enumerate(self.out_sizes):
            kw, kb = jax.random.split(jax.random.fold_in(key, i))
            w = jax.random.uniform(kw, (out, self.in_size), jnp.float32,
                                   minval=-bound, maxval=bound)
            b = jax.random.uniform(kb, (out,), jnp.float32,
                                   minval=-bound, maxval=bound)
            self.params.append((w, b))

        # Fused, pre-transposed, N-padded parameters built ONCE at init.
        # K is left at in_size (no padding needed); N is padded to a lane-dense
        # multiple of 128 so the kernel's stores are full unmasked vst.
        self.n_pad = _round_up(self.total_out, 128)

        wt_cat = jnp.concatenate([w.T for (w, _) in self.params], axis=1)   # (K, total_out)
        b_cat = jnp.concatenate([b for (_, b) in self.params], axis=0)      # (total_out,)

        self.wt_pad = (jnp.zeros((self.in_size, self.n_pad), param_dtype)
                       .at[:, :self.total_out].set(wt_cat.astype(param_dtype)))
        self.b_pad = (jnp.zeros((1, self.n_pad), param_dtype)
                      .at[0, :self.total_out].set(b_cat.astype(param_dtype)))

        # Static per-head column offsets into the fused output.
        self.offsets = []
        off = 0
        for out in self.out_sizes:
            self.offsets.append((off, off + out))
            off += out

    def forward_fused(self, x):
        """Lane-dense fused slab (B, total_out) — cheaper if downstream can use it."""
        y = _fused_forward(x, self.wt_pad, self.b_pad, self.total_out)
        return y[:, :self.total_out]

    def __call__(self, x):
        # One fused kernel call, then per-head column slices (matches the PyTorch
        # forward, which returns a list of per-head tensors).
        y = _fused_forward(x, self.wt_pad, self.b_pad, self.total_out)   # (B, n_pad)
        return [y[:, lo:hi] for (lo, hi) in self.offsets]


if __name__ == "__main__":
    key = jax.random.PRNGKey(0)
    k_in, k_params = jax.random.split(key)

    batch = 8
    in_size = 32
    out_sizes = [16, 24, 32]

    x = jax.random.normal(k_in, (batch, in_size), jnp.float32)

    # f32-parameter model (closest to nn.Linear numerics).
    model = MultiHeadPallas(in_size, out_sizes, k_params)
    outs = [jax.block_until_ready(o) for o in model(x)]
    for o, (w, b), out_dim in zip(outs, model.params, out_sizes):
        ref = x @ w.T + b
        assert o.shape == (batch, out_dim), o.shape
        assert jnp.allclose(o, ref, atol=1e-5, rtol=1e-5)

    # bf16-parameter variant (recommended on v6e/v7x): f32 accumulation, relaxed tol.
    model_bf16 = MultiHeadPallas(in_size, out_sizes, k_params,
                                 param_dtype=jnp.bfloat16)
    outs_bf16 = [jax.block_until_ready(o) for o in model_bf16(x)]
    for o, (w, b), out_dim in zip(outs_bf16, model.params, out_sizes):
        ref = x @ w.T + b
        assert o.shape == (batch, out_dim), o.shape
        assert jnp.allclose(o, ref, atol=5e-2, rtol=5e-2)

    print("KERNEL_OK")
</pallas_src>

<mosaic_0001>
module attributes {stable_mosaic.version = 11 : i64} {
  func.func @_fused_linear_kernel(%arg0: i32, %arg1: memref<8x32xf32, #tpu.memory_space<vmem>>, %arg2: memref<32x128xf32, #tpu.memory_space<vmem>>, %arg3: memref<1x128xf32, #tpu.memory_space<vmem>>, %arg4: memref<8x128xf32, #tpu.memory_space<vmem>>) attributes {dimension_semantics = [#tpu.dimension_semantics<parallel>], iteration_bounds = array<i64: 1>, scalar_prefetch = 0 : i64, scratch_operands = 0 : i64, tpu.core_type = #tpu.core_type<tc>, window_params = [{transform_indices = @transform_0, window_bounds = array<i64: 8, 32>}, {pipeline_mode = #tpu.pipeline_mode<synchronous>, transform_indices = @transform_1, window_bounds = array<i64: 32, 128>}, {pipeline_mode = #tpu.pipeline_mode<synchronous>, transform_indices = @transform_2, window_bounds = array<i64: 1, 128>}, {transform_indices = @transform_3, window_bounds = array<i64: 8, 128>}]} {
    %c0 = arith.constant 0 : index
    %c0_0 = arith.constant 0 : index
    %0 = vector.load %arg1[%c0, %c0_0] : memref<8x32xf32, #tpu.memory_space<vmem>>, vector<8x32xf32>
    %c0_1 = arith.constant 0 : index
    %c0_2 = arith.constant 0 : index
    %1 = vector.load %arg2[%c0_1, %c0_2] : memref<32x128xf32, #tpu.memory_space<vmem>>, vector<32x128xf32>
    %cst = arith.constant dense<0.000000e+00> : vector<8x128xf32>
    %2 = tpu.matmul %0, %1, %cst {dimension_numbers = #tpu.dot_dimension_numbers<[1], [0], [0], [1], [0, 0, 1, 1], [], []>} : vector<8x32xf32>, vector<32x128xf32>, vector<8x128xf32> -> vector<8x128xf32>
    %c0_3 = arith.constant 0 : index
    %c0_4 = arith.constant 0 : index
    %3 = vector.load %arg3[%c0_3, %c0_4] : memref<1x128xf32, #tpu.memory_space<vmem>>, vector<1x128xf32>
    %4 = vector.broadcast %3 : vector<1x128xf32> to vector<8x128xf32>
    %5 = arith.addf %2, %4 : vector<8x128xf32>
    %c0_5 = arith.constant 0 : index
    %c0_6 = arith.constant 0 : index
    %6 = vector.load %arg4[%c0_5, %c0_6] : memref<8x128xf32, #tpu.memory_space<vmem>>, vector<8x128xf32>
    tpu.vector_store %arg4[%c0_5, %c0_6], %5 {strides = array<i32>} : memref<8x128xf32, #tpu.memory_space<vmem>>, vector<8x128xf32>,
    return
  }
  func.func @transform_0(%arg0: i32) -> (i32, i32) {
    %c0_i32 = arith.constant 0 : i32
    %c0_i32_0 = arith.constant 0 : i32
    return %arg0, %c0_i32 : i32, i32
  }
  func.func @transform_1(%arg0: i32) -> (i32, i32) {
    %c0_i32 = arith.constant 0 : i32
    %c0_i32_0 = arith.constant 0 : i32
    %c0_i32_1 = arith.constant 0 : i32
    return %c0_i32, %c0_i32_0 : i32, i32
  }
  func.func @transform_2(%arg0: i32) -> (i32, i32) {
    %c0_i32 = arith.constant 0 : i32
    %c0_i32_0 = arith.constant 0 : i32
    %c0_i32_1 = arith.constant 0 : i32
    return %c0_i32, %c0_i32_0 : i32, i32
  }
  func.func @transform_3(%arg0: i32) -> (i32, i32) {
    %c0_i32 = arith.constant 0 : i32
    %c0_i32_0 = arith.constant 0 : i32
    return %arg0, %c0_i32 : i32, i32
  }
}

</mosaic_0001>

<llo_original>
// kernel: _fused_forward.1
$region0: #{_fused_forward.1}
  #allocation0 [shape = 'u32[]', space=smem, size = 0x4, offset = 0x4, fixed_abs, tag = 'smem constant byte address 0x4 - core index']
  #allocation1 [shape = 'u32[144,128]{1,0:T(1,128)}', space=vmem, size = 0x12000, scoped, tag = 'internal scratch']
  %s0 = inlined_call_operand.hbm [shape: f32[8,32], index: 0, kind: input, shape index: {}]
  %s1 = inlined_call_operand.hbm [shape: f32[32,128], index: 1, kind: input, shape index: {}]
  %s2 = inlined_call_operand.vmem [shape: f32[1,128], index: 2, kind: input, shape index: {}]
  %s3 = inlined_call_operand.hbm [shape: f32[8,128], index: 3, kind: output, shape index: {}]
  %s4 = sld [smem:[#allocation0]]
  $region30: #{_fused_forward.1} parent=0
    _
  %s6 = ssub.s32 1, %s4
  %s7 = scalar_select 0, %s6, %s4
  $region1: #{_fused_forward.1} parent=0
    #allocation2 [shape = 'u8[4096]{0}', space=vmem, size = 0x1000, scoped, tag = 'input window, operand 0, single buffered']
    #allocation3 [shape = 's32[1]{0}', space=sflag, size = 0x4, scoped, tag = 'scoped memory for _fused_forward.1']
    #allocation4 [shape = 's32[1]{0}', space=sflag, size = 0x4, scoped, tag = 'scoped memory for _fused_forward.1']
    #allocation5 [shape = 'u8[16384]{0}', space=vmem, size = 0x4000, scoped, tag = 'input window, operand 1, single buffered']
    #allocation6 [shape = 's32[1]{0}', space=sflag, size = 0x4, scoped, tag = 'scoped memory for _fused_forward.1']
    #allocation7 [shape = 'u8[4096]{0}', space=vmem, size = 0x1000, scoped, tag = 'output window, operand 0, single buffered']
    %8 = vsyncpa [#allocation3], 0
    %9 = vsyncpa [#allocation6], 0
    %10 = vsyncpa [#allocation4], 0
    // Predicated region
    $region2: #{_fused_forward.1} parent=1 // pred_check
      _
    $region3: #{_fused_forward.1} parent=1 // pred_check_branch
      %12 = sbr.rel (0) target = $region5
    $region4: #{_fused_forward.1} parent=1 // pred_region
      %s14 = ssub.s32 128, 128
      %15 = vsyncadd [#allocation3], %s14
      %s17 = sshll.u32 [#allocation2], 4
      %s18 = int_to_ptr.vmem [resolvable:$true] %s17
      %20 = dma.hbm_to_vmem [thread:$0]  %s0, 128, %s18, [#allocation3]
    $region5: #{_fused_forward.1} parent=1 // pred_fallthru
      _
    // Predicated region
    $region6: #{_fused_forward.1} parent=1 // pred_check
      _
    $region7: #{_fused_forward.1} parent=1 // pred_check_branch
      %22 = sbr.rel (0) target = $region9
    $region8: #{_fused_forward.1} parent=1 // pred_region
      %s24 = ssub.s32 512, 512
      %25 = vsyncadd [#allocation6], %s24
      %s26 = sshll.u32 [#allocation5], 4
      %s27 = int_to_ptr.vmem [resolvable:$true] %s26
      %32 = dma.hbm_to_vmem [thread:$0]  %s1, 512, %s27, [#allocation6], 128, 128, 8
    $region9: #{_fused_forward.1} parent=1 // pred_fallthru
      _
    // Predicated region
    $region10: #{_fused_forward.1} parent=1 // pred_check
      _
    $region11: #{_fused_forward.1} parent=1 // pred_check_branch
      %34 = sbr.rel (0) target = $region13
    $region12: #{_fused_forward.1} parent=1 // pred_region
      _
    $region13: #{_fused_forward.1} parent=1 // pred_fallthru
      _
    // Predicated region
    $region14: #{_fused_forward.1} parent=1 // pred_check
      _
    $region15: #{_fused_forward.1} parent=1 // pred_check_branch
      %36 = sbr.rel (0) target = $region17
    $region16: #{_fused_forward.1} parent=1 // pred_region
      %37 = dma.done [#allocation3], 128
    $region17: #{_fused_forward.1} parent=1 // pred_fallthru
      _
    // Predicated region
    $region18: #{_fused_forward.1} parent=1 // pred_check
      _
    $region19: #{_fused_forward.1} parent=1 // pred_check_branch
      %39 = sbr.rel (0) target = $region21
    $region20: #{_fused_forward.1} parent=1 // pred_region
      %40 = dma.done [#allocation6], 512
    $region21: #{_fused_forward.1} parent=1 // pred_fallthru
      _
    %v41 = vld [vmem:[#allocation2] sm:$0xff]
    %v42 = vld [vmem:[#allocation5] sm:$0xff]
    %v43 = vld [vmem:[#allocation5 + $0x8] sm:$0xff]
    %v44 = vld [vmem:[#allocation5 + $0x10] sm:$0xff]
    %v45 = vld [vmem:[#allocation5 + $0x18] sm:$0xff]
    %v46 = vld [vmem:[%s2] sm:$0x1]
    %v48 = vlaneseq
    %v49 = vshrl.u32 %v48, 7
    %v50 = vsub.s32 0, %v49
    %v51 = vrot.slane %v46, %v50
    %vm53 = vcmask 261120
    %v55 = vsel %vm53, %v41, 0
    %57 = vmatprep.subr.mxu0 0.0
    %58 = vmatpush1.msra.mxu0 %v42
    %59 = vmatprep.subr.mxu0 0.0
    %60 = vmatpush1.msra.mxu0 %v43
    %61 = vmatprep.subr.mxu0 0.0
    %62 = vmatpush1.msra.mxu0 %v44
    %63 = vmatprep.subr.mxu0 0.0
    %64 = vmatpush1.msra.mxu0 %v45
    %65 = vmatprep.subr.mxu0 0.0
    %66 = vmatpush1.msra.mxu0 0.0
    %67 = vmatprep.subr.mxu0 0.0
    %68 = vmatpush1.msra.mxu0 0.0
    %69 = vmatprep.subr.mxu0 0.0
    %70 = vmatpush1.msra.mxu0 0.0
    %71 = vmatprep.subr.mxu0 0.0
    %72 = vmatpush1.msra.mxu0 0.0
    %73 = vmatprep.subr.mxu0 0.0
    %74 = vmatpush1.msra.mxu0 0.0
    %75 = vmatprep.subr.mxu0 0.0
    %76 = vmatpush1.msra.mxu0 0.0
    %77 = vmatprep.subr.mxu0 0.0
    %78 = vmatpush1.msra.mxu0 0.0
    %79 = vmatprep.subr.mxu0 0.0
    %80 = vmatpush1.msra.mxu0 0.0
    %81 = vmatprep.subr.mxu0 0.0
    %82 = vmatpush1.msra.mxu0 0.0
    %83 = vmatprep.subr.mxu0 0.0
    %84 = vmatpush1.msra.mxu0 0.0
    %85 = vmatprep.subr.mxu0 0.0
    %86 = vmatpush1.msra.mxu0 0.0
    %87 = vmatprep.subr.mxu0 0.0
    %88 = vmatpush1.msra.mxu0 0.0
    %89 = vmatprep.subr.mxu0 0.0
    %90 = vmatpush1.msra.mxu0 0.0
    %91 = vmatprep.subr.mxu0 0.0
    %92 = vmatpush1.msra.mxu0 0.0
    %93 = vmatprep.subr.mxu0 0.0
    %94 = vmatpush1.msra.mxu0 0.0
    %95 = vmatprep.subr.mxu0 0.0
    %96 = vmatpush1.msra.mxu0 0.0
    %97 = vmatprep.subr.mxu0 0.0
    %98 = vmatpush1.msra.mxu0 0.0
    %99 = vmatprep.subr.mxu0 0.0
    %100 = vmatpush1.msra.mxu0 0.0
    %101 = vmatprep.subr.mxu0 0.0
    %102 = vmatpush1.msra.mxu0 0.0
    %103 = vmatprep.subr.mxu0 0.0
    %104 = vmatpush1.msra.mxu0 0.0
    %105 = vmatprep.subr.mxu0 0.0
    %106 = vmatpush1.msra.mxu0 0.0
    %107 = vmatprep.subr.mxu0 0.0
    %108 = vmatpush1.msra.mxu0 0.0
    %109 = vmatprep.subr.mxu0 0.0
    %110 = vmatpush1.msra.mxu0 0.0
    %111 = vmatprep.subr.mxu0 0.0
    %112 = vmatpush1.msra.mxu0 0.0
    %113 = vmatprep.subr.mxu0 0.0
    %114 = vmatpush1.msra.mxu0 0.0
    %115 = vmatprep.subr.mxu0 0.0
    %116 = vmatpush1.msra.mxu0 0.0
    %117 = vmatprep.subr.mxu0 0.0
    %118 = vmatpush1.msra.mxu0 0.0
    %119 = vmatprep.subr.mxu0 0.0
    %120 = vmatpush1.msra.mxu0 0.0
    %121 = vmatprep.mubr.f32.mxu0 0.0
    %122 = vmatmul.mubr.f32.gmra.mrb[0].mxu0 %v55
    %v123 = vpop.f32.mrb[0].mxu0
    %v124 = vadd.f32 %v51, %v123
    %v125 = vpop.f32.mrb[0].mxu0
    %126 = vdwg.mxu0
    %127 = vst [vmem:[#allocation7] sm:$0xff] %v124
    // Predicated region
    $region22: #{_fused_forward.1} parent=1 // pred_check
      _
    $region23: #{_fused_forward.1} parent=1 // pred_check_branch
      %129 = sbr.rel (0) target = $region25
    $region24: #{_fused_forward.1} parent=1 // pred_region
      %s131 = ssub.s32 128, 128
      %132 = vsyncadd [#allocation4], %s131
      %s134 = sshll.u32 [#allocation7], 4
      %s135 = int_to_ptr.vmem [resolvable:$true] %s134
      %137 = dma.vmem_to_hbm [thread:$0]  %s135, 128, %s3, [#allocation4]
    $region25: #{_fused_forward.1} parent=1 // pred_fallthru
      _
    // Predicated region
    $region26: #{_fused_forward.1} parent=1 // pred_check
      _
    $region27: #{_fused_forward.1} parent=1 // pred_check_branch
      %139 = sbr.rel (0) target = $region29
    $region28: #{_fused_forward.1} parent=1 // pred_region
      %140 = dma.done [#allocation4], 128
    $region29: #{_fused_forward.1} parent=1 // pred_fallthru
      _
    %141 = vsyncpa [#allocation3], 1
    %142 = vsyncpa [#allocation6], 1
    %143 = vsyncpa [#allocation4], 1

</llo_original>
